<compile_context>
chip_gen: v6e
topology: v6e:2x2x1
jax: 0.10.0
libtpu: 0.0.40
codegen_flags: <defaults>
</compile_context>

<pallas_src>
import jax
import jax.numpy as jnp
from jax.experimental import pallas as pl
from jax.experimental.pallas import tpu as pltpu


def base_func_kernel(s_ref, a_ref,
                     w1s_ref, w1a_ref, b1_ref,
                     w2_ref, b2_ref,
                     w3_ref, b3_ref,
                     w4_ref, b4_ref,
                     w5_ref, b5_ref,
                     o_ref):
    # Layer 1: cat([s, a], dim=1) @ W1 + b1  ==  s @ W1[:Ds] + a @ W1[Ds:] + b1
    h = jnp.dot(s_ref[...], w1s_ref[...], preferred_element_type=jnp.float32)
    h = h + jnp.dot(a_ref[...], w1a_ref[...], preferred_element_type=jnp.float32)
    h = jnp.maximum(h + b1_ref[...], 0.0)

    # Layer 2: (TB, 2H) @ (2H, 3H)
    h = jnp.dot(h, w2_ref[...], preferred_element_type=jnp.float32) + b2_ref[...]
    h = jnp.maximum(h, 0.0)

    # Layer 3: (TB, 3H) @ (3H, 2H)
    h = jnp.dot(h, w3_ref[...], preferred_element_type=jnp.float32) + b3_ref[...]
    h = jnp.maximum(h, 0.0)

    # Layer 4: (TB, 2H) @ (2H, H)
    h = jnp.dot(h, w4_ref[...], preferred_element_type=jnp.float32) + b4_ref[...]
    h = jnp.maximum(h, 0.0)

    # Layer 5 (no ReLU): (TB, H) @ (H, 1)
    out = jnp.dot(h, w5_ref[...], preferred_element_type=jnp.float32) + b5_ref[...]
    o_ref[...] = out.astype(o_ref.dtype)


def base_func(states, actions, params, *, block_b=512):
    """Forward pass of BaseFunc.

    params = (w1, b1, w2, b2, w3, b3, w4, b4, w5, b5) with w_i of shape
    (fan_in, fan_out) (i.e. transposed vs. torch.nn.Linear.weight).
    """
    assert states.ndim == 2 and actions.ndim == 2
    assert states.shape[0] == actions.shape[0]
    B, Ds = states.shape
    _, Da = actions.shape
    w1, b1, w2, b2, w3, b3, w4, b4, w5, b5 = params
    assert w1.shape[0] == Ds + Da

    # Split the first weight so the concat never happens inside the kernel.
    w1s = w1[:Ds, :]
    w1a = w1[Ds:, :]
    # Biases as (1, out) 2D rows (broadcast along the batch/sublane axis).
    b1r, b2r, b3r, b4r, b5r = (b.reshape(1, -1) for b in (b1, b2, b3, b4, b5))

    # Batch tile: full batch for small B (block == full dim is always legal),
    # otherwise a multiple of 8 (f32 sublane granularity).
    tb = B if B <= block_b else block_b
    grid = (pl.cdiv(B, tb),)

    def batch_map(i):
        return (i, 0)

    def whole_map(i):
        return (0, 0)

    # Resident weights / biases: constant block index -> DMA'd once, kept in VMEM.
    full_spec = lambda arr: pl.BlockSpec(arr.shape, whole_map)

    out_dtype = jnp.promote_types(jnp.promote_types(states.dtype, actions.dtype),
                                  w1.dtype)
    return pl.pallas_call(
        base_func_kernel,
        out_shape=jax.ShapeDtypeStruct((B, 1), out_dtype),
        grid=grid,
        in_specs=[
            pl.BlockSpec((tb, Ds), batch_map),
            pl.BlockSpec((tb, Da), batch_map),
            full_spec(w1s), full_spec(w1a), full_spec(b1r),
            full_spec(w2), full_spec(b2r),
            full_spec(w3), full_spec(b3r),
            full_spec(w4), full_spec(b4r),
            full_spec(w5), full_spec(b5r),
        ],
        out_specs=pl.BlockSpec((tb, 1), batch_map),
        compiler_params=pltpu.CompilerParams(
            dimension_semantics=("parallel",)),
    )(states, actions, w1s, w1a, b1r, w2, b2r, w3, b3r, w4, b4r, w5, b5r)


def _init_linear(key, fan_in, fan_out, dtype=jnp.float32):
    kw, kb = jax.random.split(key)
    bound = 1.0 / jnp.sqrt(fan_in)
    w = jax.random.uniform(kw, (fan_in, fan_out), dtype, -bound, bound)
    b = jax.random.uniform(kb, (fan_out,), dtype, -bound, bound)
    return w, b


def _ref_forward(states, actions, params):
    x = jnp.concatenate([states, actions], axis=1)
    w1, b1, w2, b2, w3, b3, w4, b4, w5, b5 = params
    x = jnp.maximum(x @ w1 + b1, 0.0)
    x = jnp.maximum(x @ w2 + b2, 0.0)
    x = jnp.maximum(x @ w3 + b3, 0.0)
    x = jnp.maximum(x @ w4 + b4, 0.0)
    return x @ w5 + b5


if __name__ == "__main__":
    key = jax.random.PRNGKey(0)
    k_s, k_a, k1, k2, k3, k4, k5 = jax.random.split(key, 7)

    B, state_dim, action_dim, hidden_dim = 2, 16, 4, 32
    input_dim = state_dim + action_dim

    states = jax.random.normal(k_s, (B, state_dim), dtype=jnp.float32)
    actions = jax.random.normal(k_a, (B, action_dim), dtype=jnp.float32)

    w1, b1 = _init_linear(k1, input_dim, hidden_dim * 2)
    w2, b2 = _init_linear(k2, hidden_dim * 2, hidden_dim * 3)
    w3, b3 = _init_linear(k3, hidden_dim * 3, hidden_dim * 2)
    w4, b4 = _init_linear(k4, hidden_dim * 2, hidden_dim)
    w5, b5 = _init_linear(k5, hidden_dim, 1)
    params = (w1, b1, w2, b2, w3, b3, w4, b4, w5, b5)

    out = base_func(states, actions, params)
    out = jax.block_until_ready(out)

    expected = _ref_forward(states, actions, params)
    assert out.shape == (B, 1), out.shape
    assert jnp.allclose(out, expected, rtol=1e-3, atol=1e-3), (out, expected)

    # Also exercise the tiled (grid > 1) path to make sure batch tiling is sound.
    B2 = 1040  # forces grid=(3,) with block_b=512 incl. a partial last tile
    k_s2, k_a2 = jax.random.split(jax.random.PRNGKey(1))
    states2 = jax.random.normal(k_s2, (B2, state_dim), dtype=jnp.float32)
    actions2 = jax.random.normal(k_a2, (B2, action_dim), dtype=jnp.float32)
    out2 = jax.block_until_ready(base_func(states2, actions2, params))
    expected2 = _ref_forward(states2, actions2, params)
    assert out2.shape == (B2, 1), out2.shape
    assert jnp.allclose(out2, expected2, rtol=1e-3, atol=1e-3)

    print("KERNEL_OK")
</pallas_src>

<mosaic_0001>
module attributes {stable_mosaic.version = 11 : i64} {
  func.func @base_func_kernel(%arg0: i32, %arg1: memref<2x16xf32, #tpu.memory_space<vmem>>, %arg2: memref<2x4xf32, #tpu.memory_space<vmem>>, %arg3: memref<16x64xf32, #tpu.memory_space<vmem>>, %arg4: memref<4x64xf32, #tpu.memory_space<vmem>>, %arg5: memref<1x64xf32, #tpu.memory_space<vmem>>, %arg6: memref<64x96xf32, #tpu.memory_space<vmem>>, %arg7: memref<1x96xf32, #tpu.memory_space<vmem>>, %arg8: memref<96x64xf32, #tpu.memory_space<vmem>>, %arg9: memref<1x64xf32, #tpu.memory_space<vmem>>, %arg10: memref<64x32xf32, #tpu.memory_space<vmem>>, %arg11: memref<1x32xf32, #tpu.memory_space<vmem>>, %arg12: memref<32x1xf32, #tpu.memory_space<vmem>>, %arg13: memref<1x1xf32, #tpu.memory_space<vmem>>, %arg14: memref<2x1xf32, #tpu.memory_space<vmem>>) attributes {dimension_semantics = [#tpu.dimension_semantics<parallel>], iteration_bounds = array<i64: 1>, scalar_prefetch = 0 : i64, scratch_operands = 0 : i64, tpu.core_type = #tpu.core_type<tc>, window_params = [{transform_indices = @transform_0, window_bounds = array<i64: 2, 16>}, {transform_indices = @transform_1, window_bounds = array<i64: 2, 4>}, {pipeline_mode = #tpu.pipeline_mode<synchronous>, transform_indices = @transform_2, window_bounds = array<i64: 16, 64>}, {pipeline_mode = #tpu.pipeline_mode<synchronous>, transform_indices = @transform_3, window_bounds = array<i64: 4, 64>}, {pipeline_mode = #tpu.pipeline_mode<synchronous>, transform_indices = @transform_4, window_bounds = array<i64: 1, 64>}, {pipeline_mode = #tpu.pipeline_mode<synchronous>, transform_indices = @transform_5, window_bounds = array<i64: 64, 96>}, {pipeline_mode = #tpu.pipeline_mode<synchronous>, transform_indices = @transform_6, window_bounds = array<i64: 1, 96>}, {pipeline_mode = #tpu.pipeline_mode<synchronous>, transform_indices = @transform_7, window_bounds = array<i64: 96, 64>}, {pipeline_mode = #tpu.pipeline_mode<synchronous>, transform_indices = @transform_8, window_bounds = array<i64: 1, 64>}, {pipeline_mode = #tpu.pipeline_mode<synchronous>, transform_indices = @transform_9, window_bounds = array<i64: 64, 32>}, {pipeline_mode = #tpu.pipeline_mode<synchronous>, transform_indices = @transform_10, window_bounds = array<i64: 1, 32>}, {pipeline_mode = #tpu.pipeline_mode<synchronous>, transform_indices = @transform_11, window_bounds = array<i64: 32, 1>}, {pipeline_mode = #tpu.pipeline_mode<synchronous>, transform_indices = @transform_12, window_bounds = array<i64: 1, 1>}, {transform_indices = @transform_13, window_bounds = array<i64: 2, 1>}]} {
    %c0 = arith.constant 0 : index
    %c0_0 = arith.constant 0 : index
    %0 = vector.load %arg1[%c0, %c0_0] : memref<2x16xf32, #tpu.memory_space<vmem>>, vector<2x16xf32>
    %c0_1 = arith.constant 0 : index
    %c0_2 = arith.constant 0 : index
    %1 = vector.load %arg3[%c0_1, %c0_2] : memref<16x64xf32, #tpu.memory_space<vmem>>, vector<16x64xf32>
    %cst = arith.constant dense<0.000000e+00> : vector<2x64xf32>
    %2 = tpu.matmul %0, %1, %cst {dimension_numbers = #tpu.dot_dimension_numbers<[1], [0], [0], [1], [0, 0, 1, 1], [], []>} : vector<2x16xf32>, vector<16x64xf32>, vector<2x64xf32> -> vector<2x64xf32>
    %c0_3 = arith.constant 0 : index
    %c0_4 = arith.constant 0 : index
    %3 = vector.load %arg2[%c0_3, %c0_4] : memref<2x4xf32, #tpu.memory_space<vmem>>, vector<2x4xf32>
    %c0_5 = arith.constant 0 : index
    %c0_6 = arith.constant 0 : index
    %4 = vector.load %arg4[%c0_5, %c0_6] : memref<4x64xf32, #tpu.memory_space<vmem>>, vector<4x64xf32>
    %cst_7 = arith.constant dense<0.000000e+00> : vector<2x64xf32>
    %5 = tpu.matmul %3, %4, %cst_7 {dimension_numbers = #tpu.dot_dimension_numbers<[1], [0], [0], [1], [0, 0, 1, 1], [], []>} : vector<2x4xf32>, vector<4x64xf32>, vector<2x64xf32> -> vector<2x64xf32>
    %6 = arith.addf %2, %5 : vector<2x64xf32>
    %c0_8 = arith.constant 0 : index
    %c0_9 = arith.constant 0 : index
    %7 = vector.load %arg5[%c0_8, %c0_9] : memref<1x64xf32, #tpu.memory_space<vmem>>, vector<1x64xf32>
    %8 = vector.broadcast %7 : vector<1x64xf32> to vector<2x64xf32>
    %9 = arith.addf %6, %8 : vector<2x64xf32>
    %cst_10 = arith.constant 0.000000e+00 : f32
    %10 = vector.broadcast %cst_10 : f32 to vector<2x64xf32>
    %11 = arith.maximumf %9, %10 : vector<2x64xf32>
    %c0_11 = arith.constant 0 : index
    %c0_12 = arith.constant 0 : index
    %12 = vector.load %arg6[%c0_11, %c0_12] : memref<64x96xf32, #tpu.memory_space<vmem>>, vector<64x96xf32>
    %cst_13 = arith.constant dense<0.000000e+00> : vector<2x96xf32>
    %13 = tpu.matmul %11, %12, %cst_13 {dimension_numbers = #tpu.dot_dimension_numbers<[1], [0], [0], [1], [0, 0, 1, 1], [], []>} : vector<2x64xf32>, vector<64x96xf32>, vector<2x96xf32> -> vector<2x96xf32>
    %c0_14 = arith.constant 0 : index
    %c0_15 = arith.constant 0 : index
    %14 = vector.load %arg7[%c0_14, %c0_15] : memref<1x96xf32, #tpu.memory_space<vmem>>, vector<1x96xf32>
    %15 = vector.broadcast %14 : vector<1x96xf32> to vector<2x96xf32>
    %16 = arith.addf %13, %15 : vector<2x96xf32>
    %cst_16 = arith.constant 0.000000e+00 : f32
    %17 = vector.broadcast %cst_16 : f32 to vector<2x96xf32>
    %18 = arith.maximumf %16, %17 : vector<2x96xf32>
    %c0_17 = arith.constant 0 : index
    %c0_18 = arith.constant 0 : index
    %19 = vector.load %arg8[%c0_17, %c0_18] : memref<96x64xf32, #tpu.memory_space<vmem>>, vector<96x64xf32>
    %cst_19 = arith.constant dense<0.000000e+00> : vector<2x64xf32>
    %20 = tpu.matmul %18, %19, %cst_19 {dimension_numbers = #tpu.dot_dimension_numbers<[1], [0], [0], [1], [0, 0, 1, 1], [], []>} : vector<2x96xf32>, vector<96x64xf32>, vector<2x64xf32> -> vector<2x64xf32>
    %c0_20 = arith.constant 0 : index
    %c0_21 = arith.constant 0 : index
    %21 = vector.load %arg9[%c0_20, %c0_21] : memref<1x64xf32, #tpu.memory_space<vmem>>, vector<1x64xf32>
    %22 = vector.broadcast %21 : vector<1x64xf32> to vector<2x64xf32>
    %23 = arith.addf %20, %22 : vector<2x64xf32>
    %cst_22 = arith.constant 0.000000e+00 : f32
    %24 = vector.broadcast %cst_22 : f32 to vector<2x64xf32>
    %25 = arith.maximumf %23, %24 : vector<2x64xf32>
    %c0_23 = arith.constant 0 : index
    %c0_24 = arith.constant 0 : index
    %26 = vector.load %arg10[%c0_23, %c0_24] : memref<64x32xf32, #tpu.memory_space<vmem>>, vector<64x32xf32>
    %cst_25 = arith.constant dense<0.000000e+00> : vector<2x32xf32>
    %27 = tpu.matmul %25, %26, %cst_25 {dimension_numbers = #tpu.dot_dimension_numbers<[1], [0], [0], [1], [0, 0, 1, 1], [], []>} : vector<2x64xf32>, vector<64x32xf32>, vector<2x32xf32> -> vector<2x32xf32>
    %c0_26 = arith.constant 0 : index
    %c0_27 = arith.constant 0 : index
    %28 = vector.load %arg11[%c0_26, %c0_27] : memref<1x32xf32, #tpu.memory_space<vmem>>, vector<1x32xf32>
    %29 = vector.broadcast %28 : vector<1x32xf32> to vector<2x32xf32>
    %30 = arith.addf %27, %29 : vector<2x32xf32>
    %cst_28 = arith.constant 0.000000e+00 : f32
    %31 = vector.broadcast %cst_28 : f32 to vector<2x32xf32>
    %32 = arith.maximumf %30, %31 : vector<2x32xf32>
    %c0_29 = arith.constant 0 : index
    %c0_30 = arith.constant 0 : index
    %33 = vector.load %arg12[%c0_29, %c0_30] : memref<32x1xf32, #tpu.memory_space<vmem>>, vector<32x1xf32>
    %cst_31 = arith.constant dense<0.000000e+00> : vector<2x1xf32>
    %34 = tpu.matmul %32, %33, %cst_31 {dimension_numbers = #tpu.dot_dimension_numbers<[1], [0], [0], [1], [0, 0, 1, 1], [], []>} : vector<2x32xf32>, vector<32x1xf32>, vector<2x1xf32> -> vector<2x1xf32>
    %c0_32 = arith.constant 0 : index
    %c0_33 = arith.constant 0 : index
    %35 = vector.load %arg13[%c0_32, %c0_33] : memref<1x1xf32, #tpu.memory_space<vmem>>, vector<1x1xf32>
    %36 = vector.broadcast %35 : vector<1x1xf32> to vector<2x1xf32>
    %37 = arith.addf %34, %36 : vector<2x1xf32>
    %c0_34 = arith.constant 0 : index
    %c0_35 = arith.constant 0 : index
    %38 = vector.load %arg14[%c0_34, %c0_35] : memref<2x1xf32, #tpu.memory_space<vmem>>, vector<2x1xf32>
    tpu.vector_store %arg14[%c0_34, %c0_35], %37 {strides = array<i32>} : memref<2x1xf32, #tpu.memory_space<vmem>>, vector<2x1xf32>,
    return
  }
  func.func @transform_0(%arg0: i32) -> (i32, i32) {
    %c0_i32 = arith.constant 0 : i32
    %c0_i32_0 = arith.constant 0 : i32
    return %arg0, %c0_i32 : i32, i32
  }
  func.func @transform_1(%arg0: i32) -> (i32, i32) {
    %c0_i32 = arith.constant 0 : i32
    %c0_i32_0 = arith.constant 0 : i32
    return %arg0, %c0_i32 : i32, i32
  }
  func.func @transform_2(%arg0: i32) -> (i32, i32) {
    %c0_i32 = arith.constant 0 : i32
    %c0_i32_0 = arith.constant 0 : i32
    %c0_i32_1 = arith.constant 0 : i32
    return %c0_i32, %c0_i32_0 : i32, i32
  }
  func.func @transform_3(%arg0: i32) -> (i32, i32) {
    %c0_i32 = arith.constant 0 : i32
    %c0_i32_0 = arith.constant 0 : i32
    %c0_i32_1 = arith.constant 0 : i32
    return %c0_i32, %c0_i32_0 : i32, i32
  }
  func.func @transform_4(%arg0: i32) -> (i32, i32) {
    %c0_i32 = arith.constant 0 : i32
    %c0_i32_0 = arith.constant 0 : i32
    %c0_i32_1 = arith.constant 0 : i32
    return %c0_i32, %c0_i32_0 : i32, i32
  }
  func.func @transform_5(%arg0: i32) -> (i32, i32) {
    %c0_i32 = arith.constant 0 : i32
    %c0_i32_0 = arith.constant 0 : i32
    %c0_i32_1 = arith.constant 0 : i32
    return %c0_i32, %c0_i32_0 : i32, i32
  }
  func.func @transform_6(%arg0: i32) -> (i32, i32) {
    %c0_i32 = arith.constant 0 : i32
    %c0_i32_0 = arith.constant 0 : i32
    %c0_i32_1 = arith.constant 0 : i32
    return %c0_i32, %c0_i32_0 : i32, i32
  }
  func.func @transform_7(%arg0: i32) -> (i32, i32) {
    %c0_i32 = arith.constant 0 : i32
    %c0_i32_0 = arith.constant 0 : i32
    %c0_i32_1 = arith.constant 0 : i32
    return %c0_i32, %c0_i32_0 : i32, i32
  }
  func.func @transform_8(%arg0: i32) -> (i32, i32) {
    %c0_i32 = arith.constant 0 : i32
    %c0_i32_0 = arith.constant 0 : i32
    %c0_i32_1 = arith.constant 0 : i32
    return %c0_i32, %c0_i32_0 : i32, i32
  }
  func.func @transform_9(%arg0: i32) -> (i32, i32) {
    %c0_i32 = arith.constant 0 : i32
    %c0_i32_0 = arith.constant 0 : i32
    %c0_i32_1 = arith.constant 0 : i32
    return %c0_i32, %c0_i32_0 : i32, i32
  }
  func.func @transform_10(%arg0: i32) -> (i32, i32) {
    %c0_i32 = arith.constant 0 : i32
    %c0_i32_0 = arith.constant 0 : i32
    %c0_i32_1 = arith.constant 0 : i32
    return %c0_i32, %c0_i32_0 : i32, i32
  }
  func.func @transform_11(%arg0: i32) -> (i32, i32) {
    %c0_i32 = arith.constant 0 : i32
    %c0_i32_0 = arith.constant 0 : i32
    %c0_i32_1 = arith.constant 0 : i32
    return %c0_i32, %c0_i32_0 : i32, i32
  }
  func.func @transform_12(%arg0: i32) -> (i32, i32) {
    %c0_i32 = arith.constant 0 : i32
    %c0_i32_0 = arith.constant 0 : i32
    %c0_i32_1 = arith.constant 0 : i32
    return %c0_i32, %c0_i32_0 : i32, i32
  }
  func.func @transform_13(%arg0: i32) -> (i32, i32) {
    %c0_i32 = arith.constant 0 : i32
    %c0_i32_0 = arith.constant 0 : i32
    return %arg0, %c0_i32 : i32, i32
  }
}

</mosaic_0001>

<llo_original>
// kernel: tpu_custom_call.1
$region0: #{tpu_custom_call.1}
  #allocation0 [shape = 'u32[]', space=smem, size = 0x4, offset = 0x4, fixed_abs, tag = 'smem constant byte address 0x4 - core index']
  #allocation1 [shape = 'u32[144,128]{1,0:T(1,128)}', space=vmem, size = 0x12000, scoped, tag = 'internal scratch']
  #allocation2 [shape = 'f32[1,1]{1,0:T(1,128)S(1)}', space=vmem, size = 0x200, scoped, tag = 'scoped memory for tpu_custom_call.1']
  %s0 = inlined_call_operand.vmem [shape: f32[2,16], index: 0, kind: input, shape index: {}]
  %s1 = inlined_call_operand.vmem [shape: f32[2,4], index: 1, kind: input, shape index: {}]
  %s2 = inlined_call_operand.vmem [shape: f32[16,64], index: 2, kind: input, shape index: {}]
  %s3 = inlined_call_operand.vmem [shape: f32[4,64], index: 3, kind: input, shape index: {}]
  %s4 = inlined_call_operand.vmem [shape: f32[1,64], index: 4, kind: input, shape index: {}]
  %s5 = inlined_call_operand.vmem [shape: f32[64,96], index: 5, kind: input, shape index: {}]
  %s6 = inlined_call_operand.vmem [shape: f32[1,96], index: 6, kind: input, shape index: {}]
  %s7 = inlined_call_operand.vmem [shape: f32[96,64], index: 7, kind: input, shape index: {}]
  %s8 = inlined_call_operand.vmem [shape: f32[1,64], index: 8, kind: input, shape index: {}]
  %s9 = inlined_call_operand.vmem [shape: f32[64,32], index: 9, kind: input, shape index: {}]
  %s10 = inlined_call_operand.vmem [shape: f32[1,32], index: 10, kind: input, shape index: {}]
  %s11 = inlined_call_operand.vmem [shape: f32[32,1], index: 11, kind: input, shape index: {}]
  %s12 = inlined_call_operand.<no memory space> [shape: f32[1,1], index: 12, kind: input, shape index: {}]
  %s13 = inlined_call_operand.vmem [shape: f32[2,1], index: 13, kind: output, shape index: {}]
  %s14 = sld [smem:[#allocation0]]
  $region62: #{tpu_custom_call.1} parent=0
    _
  %s16 = ssub.s32 1, %s14
  %s17 = scalar_select 0, %s16, %s14
  %v18 = vstv %s12
  %19 = vst [vmem:[#allocation2] sm:$0x1] %v18
  // Predicated region
  $region2: #{tpu_custom_call.1} parent=0 // pred_check
    _
  $region3: #{tpu_custom_call.1} parent=0 // pred_check_branch
    %21 = sbr.rel (0) target = $region5
  $region4: #{tpu_custom_call.1} parent=0 // pred_region
    _
  $region5: #{tpu_custom_call.1} parent=0 // pred_fallthru
    _
  // Predicated region
  $region6: #{tpu_custom_call.1} parent=0 // pred_check
    _
  $region7: #{tpu_custom_call.1} parent=0 // pred_check_branch
    %23 = sbr.rel (0) target = $region9
  $region8: #{tpu_custom_call.1} parent=0 // pred_region
    _
  $region9: #{tpu_custom_call.1} parent=0 // pred_fallthru
    _
  // Predicated region
  $region10: #{tpu_custom_call.1} parent=0 // pred_check
    _
  $region11: #{tpu_custom_call.1} parent=0 // pred_check_branch
    %25 = sbr.rel (0) target = $region13
  $region12: #{tpu_custom_call.1} parent=0 // pred_region
    _
  $region13: #{tpu_custom_call.1} parent=0 // pred_fallthru
    _
  // Predicated region
  $region14: #{tpu_custom_call.1} parent=0 // pred_check
    _
  $region15: #{tpu_custom_call.1} parent=0 // pred_check_branch
    %27 = sbr.rel (0) target = $region17
  $region16: #{tpu_custom_call.1} parent=0 // pred_region
    _
  $region17: #{tpu_custom_call.1} parent=0 // pred_fallthru
    _
  // Predicated region
  $region18: #{tpu_custom_call.1} parent=0 // pred_check
    _
  $region19: #{tpu_custom_call.1} parent=0 // pred_check_branch
    %29 = sbr.rel (0) target = $region21
  $region20: #{tpu_custom_call.1} parent=0 // pred_region
    _
  $region21: #{tpu_custom_call.1} parent=0 // pred_fallthru
    _
  // Predicated region
  $region22: #{tpu_custom_call.1} parent=0 // pred_check
    _
  $region23: #{tpu_custom_call.1} parent=0 // pred_check_branch
    %31 = sbr.rel (0) target = $region25
  $region24: #{tpu_custom_call.1} parent=0 // pred_region
    _
  $region25: #{tpu_custom_call.1} parent=0 // pred_fallthru
    _
  // Predicated region
  $region26: #{tpu_custom_call.1} parent=0 // pred_check
    _
  $region27: #{tpu_custom_call.1} parent=0 // pred_check_branch
    %33 = sbr.rel (0) target = $region29
  $region28: #{tpu_custom_call.1} parent=0 // pred_region
    _
  $region29: #{tpu_custom_call.1} parent=0 // pred_fallthru
    _
  // Predicated region
  $region30: #{tpu_custom_call.1} parent=0 // pred_check
    _
  $region31: #{tpu_custom_call.1} parent=0 // pred_check_branch
    %35 = sbr.rel (0) target = $region33
  $region32: #{tpu_custom_call.1} parent=0 // pred_region
    _
  $region33: #{tpu_custom_call.1} parent=0 // pred_fallthru
    _
  // Predicated region
  $region34: #{tpu_custom_call.1} parent=0 // pred_check
    _
  $region35: #{tpu_custom_call.1} parent=0 // pred_check_branch
    %37 = sbr.rel (0) target = $region37
  $region36: #{tpu_custom_call.1} parent=0 // pred_region
    _
  $region37: #{tpu_custom_call.1} parent=0 // pred_fallthru
    _
  // Predicated region
  $region38: #{tpu_custom_call.1} parent=0 // pred_check
    _
  $region39: #{tpu_custom_call.1} parent=0 // pred_check_branch
    %39 = sbr.rel (0) target = $region41
  $region40: #{tpu_custom_call.1} parent=0 // pred_region
    _
  $region41: #{tpu_custom_call.1} parent=0 // pred_fallthru
    _
  // Predicated region
  $region42: #{tpu_custom_call.1} parent=0 // pred_check
    _
  $region43: #{tpu_custom_call.1} parent=0 // pred_check_branch
    %41 = sbr.rel (0) target = $region45
  $region44: #{tpu_custom_call.1} parent=0 // pred_region
    _
  $region45: #{tpu_custom_call.1} parent=0 // pred_fallthru
    _
  // Predicated region
  $region46: #{tpu_custom_call.1} parent=0 // pred_check
    _
  $region47: #{tpu_custom_call.1} parent=0 // pred_check_branch
    %43 = sbr.rel (0) target = $region49
  $region48: #{tpu_custom_call.1} parent=0 // pred_region
    _
  $region49: #{tpu_custom_call.1} parent=0 // pred_fallthru
    _
  // Predicated region
  $region50: #{tpu_custom_call.1} parent=0 // pred_check
    _
  $region51: #{tpu_custom_call.1} parent=0 // pred_check_branch
    %45 = sbr.rel (0) target = $region53
  $region52: #{tpu_custom_call.1} parent=0 // pred_region
    _
  $region53: #{tpu_custom_call.1} parent=0 // pred_fallthru
    _
  %v46 = vld [vmem:[%s0] sm:$0x3]
  %v47 = vld [vmem:[%s2] sm:$0xff]
  %v48 = vld [vmem:[%s2 + $0x8] sm:$0xff]
  %v49 = vld [vmem:[%s1] sm:$0x3]
  %v50 = vld [vmem:[%s3] sm:$0xf]
  %vm51 = vcmask 31744
  %v53 = vsel %vm51, %v49, 0
  %vm55 = vcmask 1043456
  %v57 = vsel %vm55, %v50, 0
  %59 = vmatprep.subr.mxu0 0.0
  %60 = vmatpush1.msra.mxu0 0.0
  %61 = vmatprep.subr.mxu0 0.0
  %62 = vmatpush1.msra.mxu0 0.0
  %63 = vmatprep.subr.mxu0 0.0
  %64 = vmatpush1.msra.mxu0 0.0
  %65 = vmatprep.subr.mxu0 0.0
  %66 = vmatpush1.msra.mxu0 0.0
  %67 = vmatprep.subr.mxu0 0.0
  %68 = vmatpush1.msra.mxu0 0.0
  %69 = vmatprep.subr.mxu0 0.0
  %70 = vmatpush1.msra.mxu0 0.0
  %71 = vmatprep.subr.mxu0 0.0
  %72 = vmatpush1.msra.mxu0 0.0
  %73 = vmatprep.subr.mxu0 0.0
  %74 = vmatpush1.msra.mxu0 0.0
  %75 = vmatprep.subr.mxu0 0.0
  %76 = vmatpush1.msra.mxu0 0.0
  %77 = vmatprep.subr.mxu0 0.0
  %78 = vmatpush1.msra.mxu0 0.0
  %79 = vmatprep.subr.mxu0 0.0
  %80 = vmatpush1.msra.mxu0 0.0
  %81 = vmatprep.subr.mxu0 0.0
  %82 = vmatpush1.msra.mxu0 0.0
  %83 = vmatprep.subr.mxu0 0.0
  %84 = vmatpush1.msra.mxu0 0.0
  %85 = vmatprep.subr.mxu0 0.0
  %86 = vmatpush1.msra.mxu0 0.0
  %87 = vmatprep.subr.mxu0 0.0
  %88 = vmatpush1.msra.mxu0 0.0
  %89 = vmatprep.subr.mxu0 0.0
  %90 = vmatpush1.msra.mxu0 %v57
  %91 = vmatprep.subr.mxu0 0.0
  %92 = vmatpush2.msra.mxu0 0.0
  %93 = vmatprep.subr.mxu0 0.0
  %94 = vmatpush2.msra.mxu0 0.0
  %95 = vmatprep.subr.mxu0 0.0
  %96 = vmatpush2.msra.mxu0 0.0
  %97 = vmatprep.subr.mxu0 0.0
  %98 = vmatpush2.msra.mxu0 0.0
  %99 = vmatprep.subr.mxu0 0.0
  %100 = vmatpush2.msra.mxu0 0.0
  %101 = vmatprep.subr.mxu0 0.0
  %102 = vmatpush2.msra.mxu0 0.0
  %103 = vmatprep.subr.mxu0 0.0
  %104 = vmatpush2.msra.mxu0 0.0
  %105 = vmatprep.subr.mxu0 0.0
  %106 = vmatpush2.msra.mxu0 0.0
  %107 = vmatprep.subr.mxu0 0.0
  %108 = vmatpush2.msra.mxu0 0.0
  %109 = vmatprep.subr.mxu0 0.0
  %110 = vmatpush2.msra.mxu0 0.0
  %111 = vmatprep.subr.mxu0 0.0
  %112 = vmatpush2.msra.mxu0 0.0
  %113 = vmatprep.subr.mxu0 0.0
  %114 = vmatpush2.msra.mxu0 0.0
  %115 = vmatprep.subr.mxu0 0.0
  %116 = vmatpush2.msra.mxu0 0.0
  %117 = vmatprep.subr.mxu0 0.0
  %118 = vmatpush2.msra.mxu0 0.0
  %119 = vmatprep.subr.mxu0 0.0
  %120 = vmatpush2.msra.mxu0 0.0
  %121 = vmatprep.subr.mxu0 0.0
  %122 = vmatpush2.msra.mxu0 0.0
  %123 = vmatprep.mubr.f32.mxu0 0.0
  %124 = vmatmul.mubr.f32.gmra.mxu0 %v53
  %v125 = vpop.f32.mrf.mxu0
  %v126 = vadd.f32 0.0, %v125
  %v127 = vpop.f32.mrf.mxu0
  %128 = vdwg.mxu0
  %vm129 = vcmask 130048
  %v131 = vsel %vm129, %v46, 0
  %133 = vmatprep.subr.mxu0 0.0
  %134 = vmatpush1.msra.mxu0 0.0
  %135 = vmatprep.subr.mxu0 0.0
  %136 = vmatpush1.msra.mxu0 0.0
  %137 = vmatprep.subr.mxu0 0.0
  %138 = vmatpush1.msra.mxu0 0.0
  %139 = vmatprep.subr.mxu0 0.0
  %140 = vmatpush1.msra.mxu0 0.0
  %141 = vmatprep.subr.mxu0 0.0
  %142 = vmatpush1.msra.mxu0 0.0
  %143 = vmatprep.subr.mxu0 0.0
  %144 = vmatpush1.msra.mxu0 0.0
  %145 = vmatprep.subr.mxu0 0.0
  %146 = vmatpush1.msra.mxu0 0.0
  %147 = vmatprep.subr.mxu0 0.0
  %148 = vmatpush1.msra.mxu0 0.0
  %149 = vmatprep.subr.mxu0 0.0
  %150 = vmatpush1.msra.mxu0 0.0
  %151 = vmatprep.subr.mxu0 0.0
  %152 = vmatpush1.msra.mxu0 0.0
  %153 = vmatprep.subr.mxu0 0.0
  %154 = vmatpush1.msra.mxu0 0.0
  %155 = vmatprep.subr.mxu0 0.0
  %156 = vmatpush1.msra.mxu0 0.0
  %157 = vmatprep.subr.mxu0 0.0
  %158 = vmatpush1.msra.mxu0 0.0
  %159 = vmatprep.subr.mxu0 0.0
  %160 = vmatpush1.msra.mxu0 0.0
  %161 = vmatprep.subr.mxu0 0.0
  %162 = vmatpush1.msra.mxu0 %v48
  %163 = vmatprep.subr.mxu0 0.0
  %164 = vmatpush1.msra.mxu0 %v47
  %165 = vmatprep.subr.mxu0 0.0
  %166 = vmatpush2.msra.mxu0 0.0
  %167 = vmatprep.subr.mxu0 0.0
  %168 = vmatpush2.msra.mxu0 0.0
  %169 = vmatprep.subr.mxu0 0.0
  %170 = vmatpush2.msra.mxu0 0.0
  %171 = vmatprep.subr.mxu0 0.0
  %172 = vmatpush2.msra.mxu0 0.0
  %173 = vmatprep.subr.mxu0 0.0
  %174 = vmatpush2.msra.mxu0 0.0
  %175 = vmatprep.subr.mxu0 0.0
  %176 = vmatpush2.msra.mxu0 0.0
  %177 = vmatprep.subr.mxu0 0.0
  %178 = vmatpush2.msra.mxu0 0.0
  %179 = vmatprep.subr.mxu0 0.0
  %180 = vmatpush2.msra.mxu0 0.0
  %181 = vmatprep.subr.mxu0 0.0
  %182 = vmatpush2.msra.mxu0 0.0
  %183 = vmatprep.subr.mxu0 0.0
  %184 = vmatpush2.msra.mxu0 0.0
  %185 = vmatprep.subr.mxu0 0.0
  %186 = vmatpush2.msra.mxu0 0.0
  %187 = vmatprep.subr.mxu0 0.0
  %188 = vmatpush2.msra.mxu0 0.0
  %189 = vmatprep.subr.mxu0 0.0
  %190 = vmatpush2.msra.mxu0 0.0
  %191 = vmatprep.subr.mxu0 0.0
  %192 = vmatpush2.msra.mxu0 0.0
  %193 = vmatprep.subr.mxu0 0.0
  %194 = vmatpush2.msra.mxu0 0.0
  %195 = vmatprep.subr.mxu0 0.0
  %196 = vmatpush2.msra.mxu0 0.0
  %197 = vmatprep.mubr.f32.mxu0 0.0
  %198 = vmatmul.mubr.f32.gmra.mxu0 %v131
  %v199 = vpop.f32.mrf.mxu0
  %v200 = vadd.f32 %v126, %v199
  %v201 = vpop.f32.mrf.mxu0
  %202 = vdwg.mxu0
  %v203 = vld [vmem:[%s4] sm:$0x1]
  %v205 = vlaneseq
  %v206 = vshrl.u32 %v205, 7
  %v207 = vsub.s32 0, %v206
  %v208 = vrot.slane %v203, %v207
  %v210 = vadd.f32 %v200, %v208
  %v211 = vmax.f32 %v210, 0.0
  %v212 = vld [vmem:[%s5] sm:$0xff]
  %v213 = vld [vmem:[%s5 + $0x8] sm:$0xff]
  %v214 = vld [vmem:[%s5 + $0x10] sm:$0xff]
  %v215 = vld [vmem:[%s5 + $0x18] sm:$0xff]
  %v216 = vld [vmem:[%s5 + $0x20] sm:$0xff]
  %v217 = vld [vmem:[%s5 + $0x28] sm:$0xff]
  %v218 = vld [vmem:[%s5 + $0x30] sm:$0xff]
  %v219 = vld [vmem:[%s5 + $0x38] sm:$0xff]
  %v220 = vld [vmem:[%s6] sm:$0x1]
  %v222 = vlaneseq
  %v223 = vshrl.u32 %v222, 7
  %v224 = vsub.s32 0, %v223
  %v225 = vrot.slane %v220, %v224
  %vm227 = vcmask 523264
  %v229 = vsel %vm227, %v211, 0
  %231 = vmatprep.subr.mxu0 0.0
  %232 = vmatpush1.msra.mxu0 0.0
  %233 = vmatprep.subr.mxu0 0.0
  %234 = vmatpush1.msra.mxu0 0.0
  %235 = vmatprep.subr.mxu0 0.0
  %236 = vmatpush1.msra.mxu0 0.0
  %237 = vmatprep.subr.mxu0 0.0
  %238 = vmatpush1.msra.mxu0 0.0
  %239 = vmatprep.subr.mxu0 0.0
  %240 = vmatpush1.msra.mxu0 0.0
  %241 = vmatprep.subr.mxu0 0.0
  %242 = vmatpush1.msra.mxu0 0.0
  %243 = vmatprep.subr.mxu0 0.0
  %244 = vmatpush1.msra.mxu0 0.0
  %245 = vmatprep.subr.mxu0 0.0
  %246 = vmatpush1.msra.mxu0 0.0
  %247 = vmatprep.subr.mxu0 0.0
  %248 = vmatpush1.msra.mxu0 %v219
  %249 = vmatprep.subr.mxu0 0.0
  %250 = vmatpush1.msra.mxu0 %v218
  %251 = vmatprep.subr.mxu0 0.0
  %252 = vmatpush1.msra.mxu0 %v217
  %253 = vmatprep.subr.mxu0 0.0
  %254 = vmatpush1.msra.mxu0 %v216
  %255 = vmatprep.subr.mxu0 0.0
  %256 = vmatpush1.msra.mxu0 %v215
  %257 = vmatprep.subr.mxu0 0.0
  %258 = vmatpush1.msra.mxu0 %v214
  %259 = vmatprep.subr.mxu0 0.0
  %260 = vmatpush1.msra.mxu0 %v213
  %261 = vmatprep.subr.mxu0 0.0
  %262 = vmatpush1.msra.mxu0 %v212
  %263 = vmatprep.subr.mxu0 0.0
  %264 = vmatpush2.msra.mxu0 0.0
  %265 = vmatprep.subr.mxu0 0.0
  %266 = vmatpush2.msra.mxu0 0.0
  %267 = vmatprep.subr.mxu0 0.0
  %268 = vmatpush2.msra.mxu0 0.0
  %269 = vmatprep.subr.mxu0 0.0
  %270 = vmatpush2.msra.mxu0 0.0
  %271 = vmatprep.subr.mxu0 0.0
  %272 = vmatpush2.msra.mxu0 0.0
  %273 = vmatprep.subr.mxu0 0.0
  %274 = vmatpush2.msra.mxu0 0.0
  %275 = vmatprep.subr.mxu0 0.0
  %276 = vmatpush2.msra.mxu0 0.0
  %277 = vmatprep.subr.mxu0 0.0
  %278 = vmatpush2.msra.mxu0 0.0
  %279 = vmatprep.subr.mxu0 0.0
  %280 = vmatpush2.msra.mxu0 0.0
  %281 = vmatprep.subr.mxu0 0.0
  %282 = vmatpush2.msra.mxu0 0.0
  %283 = vmatprep.subr.mxu0 0.0
  %284 = vmatpush2.msra.mxu0 0.0
  %285 = vmatprep.subr.mxu0 0.0
  %286 = vmatpush2.msra.mxu0 0.0
  %287 = vmatprep.subr.mxu0 0.0
  %288 = vmatpush2.msra.mxu0 0.0
  %289 = vmatprep.subr.mxu0 0.0
  %290 = vmatpush2.msra.mxu0 0.0
  %291 = vmatprep.subr.mxu0 0.0
  %292 = vmatpush2.msra.mxu0 0.0
  %293 = vmatprep.subr.mxu0 0.0
  %294 = vmatpush2.msra.mxu0 0.0
  %295 = vmatprep.mubr.f32.mxu0 0.0
  %296 = vmatmul.mubr.f32.gmra.mxu0 %v229
  %v297 = vpop.f32.mrf.mxu0
  %v298 = vadd.f32 %v225, %v297
  %v299 = vpop.f32.mrf.mxu0
  %300 = vdwg.mxu0
  %v301 = vmax.f32 %v298, 0.0
  %v302 = vld [vmem:[%s7] sm:$0xff]
  %v303 = vld [vmem:[%s7 + $0x8] sm:$0xff]
  %v304 = vld [vmem:[%s7 + $0x10] sm:$0xff]
  %v305 = vld [vmem:[%s7 + $0x18] sm:$0xff]
  %v306 = vld [vmem:[%s7 + $0x20] sm:$0xff]
  %v307 = vld [vmem:[%s7 + $0x28] sm:$0xff]
  %v308 = vld [vmem:[%s7 + $0x30] sm:$0xff]
  %v309 = vld [vmem:[%s7 + $0x38] sm:$0xff]
  %v310 = vld [vmem:[%s7 + $0x40] sm:$0xff]
  %v311 = vld [vmem:[%s7 + $0x48] sm:$0xff]
  %v312 = vld [vmem:[%s7 + $0x50] sm:$0xff]
  %v313 = vld [vmem:[%s7 + $0x58] sm:$0xff]
  %v314 = vld [vmem:[%s8] sm:$0x1]
  %v316 = vlaneseq
  %v317 = vshrl.u32 %v316, 7
  %v318 = vsub.s32 0, %v317
  %v319 = vrot.slane %v314, %v318
  %vm321 = vcmask 785408
  %v323 = vsel %vm321, %v301, 0
  %325 = vmatprep.subr.mxu0 0.0
  %326 = vmatpush1.msra.mxu0 0.0
  %327 = vmatprep.subr.mxu0 0.0
  %328 = vmatpush1.msra.mxu0 0.0
  %329 = vmatprep.subr.mxu0 0.0
  %330 = vmatpush1.msra.mxu0 0.0
  %331 = vmatprep.subr.mxu0 0.0
  %332 = vmatpush1.msra.mxu0 0.0
  %333 = vmatprep.subr.mxu0 0.0
  %334 = vmatpush1.msra.mxu0 %v313
  %335 = vmatprep.subr.mxu0 0.0
  %336 = vmatpush1.msra.mxu0 %v312
  %337 = vmatprep.subr.mxu0 0.0
  %338 = vmatpush1.msra.mxu0 %v311
  %339 = vmatprep.subr.mxu0 0.0
  %340 = vmatpush1.msra.mxu0 %v310
  %341 = vmatprep.subr.mxu0 0.0
  %342 = vmatpush1.msra.mxu0 %v309
  %343 = vmatprep.subr.mxu0 0.0
  %344 = vmatpush1.msra.mxu0 %v308
  %345 = vmatprep.subr.mxu0 0.0
  %346 = vmatpush1.msra.mxu0 %v307
  %347 = vmatprep.subr.mxu0 0.0
  %348 = vmatpush1.msra.mxu0 %v306
  %349 = vmatprep.subr.mxu0 0.0
  %350 = vmatpush1.msra.mxu0 %v305
  %351 = vmatprep.subr.mxu0 0.0
  %352 = vmatpush1.msra.mxu0 %v304
  %353 = vmatprep.subr.mxu0 0.0
  %354 = vmatpush1.msra.mxu0 %v303
  %355 = vmatprep.subr.mxu0 0.0
  %356 = vmatpush1.msra.mxu0 %v302
  %357 = vmatprep.subr.mxu0 0.0
  %358 = vmatpush2.msra.mxu0 0.0
  %359 = vmatprep.subr.mxu0 0.0
  %360 = vmatpush2.msra.mxu0 0.0
  %361 = vmatprep.subr.mxu0 0.0
  %362 = vmatpush2.msra.mxu0 0.0
  %363 = vmatprep.subr.mxu0 0.0
  %364 = vmatpush2.msra.mxu0 0.0
  %365 = vmatprep.subr.mxu0 0.0
  %366 = vmatpush2.msra.mxu0 0.0
  %367 = vmatprep.subr.mxu0 0.0
  %368 = vmatpush2.msra.mxu0 0.0
  %369 = vmatprep.subr.mxu0 0.0
  %370 = vmatpush2.msra.mxu0 0.0
  %371 = vmatprep.subr.mxu0 0.0
  %372 = vmatpush2.msra.mxu0 0.0
  %373 = vmatprep.subr.mxu0 0.0
  %374 = vmatpush2.msra.mxu0 0.0
  %375 = vmatprep.subr.mxu0 0.0
  %376 = vmatpush2.msra.mxu0 0.0
  %377 = vmatprep.subr.mxu0 0.0
  %378 = vmatpush2.msra.mxu0 0.0
  %379 = vmatprep.subr.mxu0 0.0
  %380 = vmatpush2.msra.mxu0 0.0
  %381 = vmatprep.subr.mxu0 0.0
  %382 = vmatpush2.msra.mxu0 0.0
  %383 = vmatprep.subr.mxu0 0.0
  %384 = vmatpush2.msra.mxu0 0.0
  %385 = vmatprep.subr.mxu0 0.0
  %386 = vmatpush2.msra.mxu0 0.0
  %387 = vmatprep.subr.mxu0 0.0
  %388 = vmatpush2.msra.mxu0 0.0
  %389 = vmatprep.mubr.f32.mxu0 0.0
  %390 = vmatmul.mubr.f32.gmra.mxu0 %v323
  %v391 = vpop.f32.mrf.mxu0
  %v392 = vadd.f32 %v319, %v391
  %v393 = vpop.f32.mrf.mxu0
  %394 = vdwg.mxu0
  %v395 = vmax.f32 %v392, 0.0
  %v396 = vld [vmem:[%s9] sm:$0xff]
  %v397 = vld [vmem:[%s9 + $0x8] sm:$0xff]
  %v398 = vld [vmem:[%s9 + $0x10] sm:$0xff]
  %v399 = vld [vmem:[%s9 + $0x18] sm:$0xff]
  %v400 = vld [vmem:[%s9 + $0x20] sm:$0xff]
  %v401 = vld [vmem:[%s9 + $0x28] sm:$0xff]
  %v402 = vld [vmem:[%s9 + $0x30] sm:$0xff]
  %v403 = vld [vmem:[%s9 + $0x38] sm:$0xff]
  %v404 = vld [vmem:[%s10] sm:$0x1]
  %v406 = vlaneseq
  %v407 = vshrl.u32 %v406, 7
  %v408 = vsub.s32 0, %v407
  %v409 = vrot.slane %v404, %v408
  %v412 = vsel %vm227, %v395, 0
  %414 = vmatprep.subr.mxu0 0.0
  %415 = vmatpush1.msra.mxu0 0.0
  %416 = vmatprep.subr.mxu0 0.0
  %417 = vmatpush1.msra.mxu0 0.0
  %418 = vmatprep.subr.mxu0 0.0
  %419 = vmatpush1.msra.mxu0 0.0
  %420 = vmatprep.subr.mxu0 0.0
  %421 = vmatpush1.msra.mxu0 0.0
  %422 = vmatprep.subr.mxu0 0.0
  %423 = vmatpush1.msra.mxu0 0.0
  %424 = vmatprep.subr.mxu0 0.0
  %425 = vmatpush1.msra.mxu0 0.0
  %426 = vmatprep.subr.mxu0 0.0
  %427 = vmatpush1.msra.mxu0 0.0
  %428 = vmatprep.subr.mxu0 0.0
  %429 = vmatpush1.msra.mxu0 0.0
  %430 = vmatprep.subr.mxu0 0.0
  %431 = vmatpush1.msra.mxu0 %v403
  %432 = vmatprep.subr.mxu0 0.0
  %433 = vmatpush1.msra.mxu0 %v402
  %434 = vmatprep.subr.mxu0 0.0
  %435 = vmatpush1.msra.mxu0 %v401
  %436 = vmatprep.subr.mxu0 0.0
  %437 = vmatpush1.msra.mxu0 %v400
  %438 = vmatprep.subr.mxu0 0.0
  %439 = vmatpush1.msra.mxu0 %v399
  %440 = vmatprep.subr.mxu0 0.0
  %441 = vmatpush1.msra.mxu0 %v398
  %442 = vmatprep.subr.mxu0 0.0
  %443 = vmatpush1.msra.mxu0 %v397
  %444 = vmatprep.subr.mxu0 0.0
  %445 = vmatpush1.msra.mxu0 %v396
  %446 = vmatprep.subr.mxu0 0.0
  %447 = vmatpush2.msra.mxu0 0.0
  %448 = vmatprep.subr.mxu0 0.0
  %449 = vmatpush2.msra.mxu0 0.0
  %450 = vmatprep.subr.mxu0 0.0
  %451 = vmatpush2.msra.mxu0 0.0
  %452 = vmatprep.subr.mxu0 0.0
  %453 = vmatpush2.msra.mxu0 0.0
  %454 = vmatprep.subr.mxu0 0.0
  %455 = vmatpush2.msra.mxu0 0.0
  %456 = vmatprep.subr.mxu0 0.0
  %457 = vmatpush2.msra.mxu0 0.0
  %458 = vmatprep.subr.mxu0 0.0
  %459 = vmatpush2.msra.mxu0 0.0
  %460 = vmatprep.subr.mxu0 0.0
  %461 = vmatpush2.msra.mxu0 0.0
  %462 = vmatprep.subr.mxu0 0.0
  %463 = vmatpush2.msra.mxu0 0.0
  %464 = vmatprep.subr.mxu0 0.0
  %465 = vmatpush2.msra.mxu0 0.0
  %466 = vmatprep.subr.mxu0 0.0
  %467 = vmatpush2.msra.mxu0 0.0
  %468 = vmatprep.subr.mxu0 0.0
  %469 = vmatpush2.msra.mxu0 0.0
  %470 = vmatprep.subr.mxu0 0.0
  %471 = vmatpush2.msra.mxu0 0.0
  %472 = vmatprep.subr.mxu0 0.0
  %473 = vmatpush2.msra.mxu0 0.0
  %474 = vmatprep.subr.mxu0 0.0
  %475 = vmatpush2.msra.mxu0 0.0
  %476 = vmatprep.subr.mxu0 0.0
  %477 = vmatpush2.msra.mxu0 0.0
  %478 = vmatprep.mubr.f32.mxu0 0.0
  %479 = vmatmul.mubr.f32.gmra.mxu0 %v412
  %v480 = vpop.f32.mrf.mxu0
  %v481 = vadd.f32 %v409, %v480
  %v482 = vpop.f32.mrf.mxu0
  %483 = vdwg.mxu0
  %v484 = vmax.f32 %v481, 0.0
  %v485 = vld [vmem:[%s11] sm:$0xff]
  %v486 = vld [vmem:[%s11 + $0x8] sm:$0xff]
  %v487 = vld [vmem:[%s11 + $0x10] sm:$0xff]
  %v488 = vld [vmem:[%s11 + $0x18] sm:$0xff]
  %v489 = vld [vmem:[#allocation2] sm:$0x1]
  %v491 = vlaneseq
  %v492 = vshrl.u32 %v491, 7
  %v493 = vsub.s32 0, %v492
  %v494 = vrot.slane %v489, %v493
  %vm496 = vcmask 261120
  %v498 = vsel %vm496, %v484, 0
  %500 = vmatprep.subr.mxu0 0.0
  %501 = vmatpush1.msra.mxu0 0.0
  %502 = vmatprep.subr.mxu0 0.0
  %503 = vmatpush1.msra.mxu0 0.0
  %504 = vmatprep.subr.mxu0 0.0
  %505 = vmatpush1.msra.mxu0 0.0
  %506 = vmatprep.subr.mxu0 0.0
  %507 = vmatpush1.msra.mxu0 0.0
  %508 = vmatprep.subr.mxu0 0.0
  %509 = vmatpush1.msra.mxu0 0.0
  %510 = vmatprep.subr.mxu0 0.0
  %511 = vmatpush1.msra.mxu0 0.0
  %512 = vmatprep.subr.mxu0 0.0
  %513 = vmatpush1.msra.mxu0 0.0
  %514 = vmatprep.subr.mxu0 0.0
  %515 = vmatpush1.msra.mxu0 0.0
  %516 = vmatprep.subr.mxu0 0.0
  %517 = vmatpush1.msra.mxu0 0.0
  %518 = vmatprep.subr.mxu0 0.0
  %519 = vmatpush1.msra.mxu0 0.0
  %520 = vmatprep.subr.mxu0 0.0
  %521 = vmatpush1.msra.mxu0 0.0
  %522 = vmatprep.subr.mxu0 0.0
  %523 = vmatpush1.msra.mxu0 0.0
  %524 = vmatprep.subr.mxu0 0.0
  %525 = vmatpush1.msra.mxu0 %v488
  %526 = vmatprep.subr.mxu0 0.0
  %527 = vmatpush1.msra.mxu0 %v487
  %528 = vmatprep.subr.mxu0 0.0
  %529 = vmatpush1.msra.mxu0 %v486
  %530 = vmatprep.subr.mxu0 0.0
  %531 = vmatpush1.msra.mxu0 %v485
  %532 = vmatprep.subr.mxu0 0.0
  %533 = vmatpush2.msra.mxu0 0.0
  %534 = vmatprep.subr.mxu0 0.0
  %535 = vmatpush2.msra.mxu0 0.0
  %536 = vmatprep.subr.mxu0 0.0
  %537 = vmatpush2.msra.mxu0 0.0
  %538 = vmatprep.subr.mxu0 0.0
  %539 = vmatpush2.msra.mxu0 0.0
  %540 = vmatprep.subr.mxu0 0.0
  %541 = vmatpush2.msra.mxu0 0.0
  %542 = vmatprep.subr.mxu0 0.0
  %543 = vmatpush2.msra.mxu0 0.0
  %544 = vmatprep.subr.mxu0 0.0
  %545 = vmatpush2.msra.mxu0 0.0
  %546 = vmatprep.subr.mxu0 0.0
  %547 = vmatpush2.msra.mxu0 0.0
  %548 = vmatprep.subr.mxu0 0.0
  %549 = vmatpush2.msra.mxu0 0.0
  %550 = vmatprep.subr.mxu0 0.0
  %551 = vmatpush2.msra.mxu0 0.0
  %552 = vmatprep.subr.mxu0 0.0
  %553 = vmatpush2.msra.mxu0 0.0
  %554 = vmatprep.subr.mxu0 0.0
  %555 = vmatpush2.msra.mxu0 0.0
  %556 = vmatprep.subr.mxu0 0.0
  %557 = vmatpush2.msra.mxu0 0.0
  %558 = vmatprep.subr.mxu0 0.0
  %559 = vmatpush2.msra.mxu0 0.0
  %560 = vmatprep.subr.mxu0 0.0
  %561 = vmatpush2.msra.mxu0 0.0
  %562 = vmatprep.subr.mxu0 0.0
  %563 = vmatpush2.msra.mxu0 0.0
  %564 = vmatprep.mubr.f32.mxu0 0.0
  %565 = vmatmul.mubr.f32.gmra.mxu0 %v498
  %v566 = vpop.f32.mrf.mxu0
  %v567 = vadd.f32 %v494, %v566
  %v568 = vpop.f32.mrf.mxu0
  %569 = vdwg.mxu0
  %vm570 = vcmask 1024
  %571 = vst.msk [vmem:[%s13] sm:$0x3] %vm570, %v567
  // Predicated region
  $region54: #{tpu_custom_call.1} parent=0 // pred_check
    _
  $region55: #{tpu_custom_call.1} parent=0 // pred_check_branch
    %573 = sbr.rel (0) target = $region57
  $region56: #{tpu_custom_call.1} parent=0 // pred_region
    _
  $region57: #{tpu_custom_call.1} parent=0 // pred_fallthru
    _
  // Predicated region
  $region58: #{tpu_custom_call.1} parent=0 // pred_check
    _
  $region59: #{tpu_custom_call.1} parent=0 // pred_check_branch
    %575 = sbr.rel (0) target = $region61
  $region60: #{tpu_custom_call.1} parent=0 // pred_region
    _
  $region61: #{tpu_custom_call.1} parent=0 // pred_fallthru
    _

</llo_original>
